<compile_context>
chip_gen: v5e
topology: v5e:2x2
jax: 0.10.0
libtpu: 0.0.40
codegen_flags: <defaults>
</compile_context>

<pallas_src>
import functools

import jax
import jax.numpy as jnp
from jax.experimental import pallas as pl
from jax.experimental.pallas import tpu as pltpu

LANE = 128       # TPU vreg lane width
SUBLANE_N = 16   # pad node count to the bf16 sublane tile (also covers f32's 8)


def _round_up(v, m):
    return (v + m - 1) // m * m


def _pad2(a, rows, cols):
    r, c = a.shape
    return jnp.pad(a, ((0, rows - r), (0, cols - c)))


# ----------------------------------------------------------------------------
# One GINConv ( MLP((1+eps)*x + A@x) with MLP = Linear -> ReLU -> Linear ),
# with the first Linear optionally pushed before the aggregation:
#   A @ (x @ W1) + (1+eps)*(x @ W1) + b1   ==   ((1+eps)*x + A@x) @ W1 + b1
# ----------------------------------------------------------------------------
def _ginconv(adj, x, w1, b1, w2, b2, *, eps, push_first_linear):
    f32 = jnp.float32
    if push_first_linear:
        t = jnp.dot(x, w1, preferred_element_type=f32)
        agg = jnp.dot(adj, t, preferred_element_type=f32)
        z = (agg + t if eps == 0.0 else agg + (1.0 + eps) * t) + b1
    else:
        agg = jnp.dot(adj, x, preferred_element_type=f32)
        z = agg + x if eps == 0.0 else agg + (1.0 + eps) * x
        z = jnp.dot(z, w1, preferred_element_type=f32) + b1
    z = jnp.maximum(z, 0.0)
    return jnp.dot(z, w2, preferred_element_type=f32) + b2


# ----------------------------------------------------------------------------
# Fused two-layer GIN kernel (everything stays in VMEM / vregs).
# ----------------------------------------------------------------------------
def gin_fused_kernel(adj_ref, x_ref,
                     w11_ref, b11_ref, w12_ref, b12_ref,
                     w21_ref, b21_ref, w22_ref, b22_ref,
                     out_ref, *, eps, push1, push2):
    adj = adj_ref[...].astype(jnp.float32)   # bf16 0/1 adjacency -> exact f32

    # ---- Layer 1: GINConv1 + outer ReLU ----
    h = _ginconv(adj, x_ref[...],
                 w11_ref[...], b11_ref[...], w12_ref[...], b12_ref[...],
                 eps=eps, push_first_linear=push1)
    h = jnp.maximum(h, 0.0)                  # F.relu(gc1(...))
    # F.dropout(h, p, training=False) -> identity.

    # ---- Layer 2: GINConv2 ----
    y = _ginconv(adj, h,
                 w21_ref[...], b21_ref[...], w22_ref[...], b22_ref[...],
                 eps=eps, push_first_linear=push2)
    out_ref[...] = y.astype(out_ref.dtype)


# ----------------------------------------------------------------------------
# Wrapper: pad to lane-dense shapes, one pallas_call, slice result.
# ----------------------------------------------------------------------------
def gin_forward(x, adj, params, dropout=0.5, training=False, eps=0.0):
    # TODO(synk): training-mode dropout (random mask + 1/(1-p) scaling) not implemented.
    del dropout, training
    n, nfeat = x.shape
    nhid = params["w1_1"].shape[1]
    nout = params["w2_1"].shape[1]

    fpad = _round_up(nfeat, LANE)
    hpad = _round_up(nhid, LANE)
    opad = _round_up(nout, LANE)
    n_pad = _round_up(n, SUBLANE_N)

    # Zero-padding is exact for the sliced [:n, :nout] output: padded adjacency
    # rows/cols are zero, so padded node rows never contaminate real rows, and
    # padded weight rows/cols + bias cols are zero, so padded feature columns
    # stay identically zero through both layers.
    xp = _pad2(x, n_pad, fpad)
    adjp = _pad2(adj, n_pad, n_pad).astype(jnp.bfloat16)  # 0/1 exact in bf16
    w11 = _pad2(params["w1_1"], fpad, hpad); b11 = _pad2(params["b1_1"], 1, hpad)
    w12 = _pad2(params["w1_2"], hpad, hpad); b12 = _pad2(params["b1_2"], 1, hpad)
    w21 = _pad2(params["w2_1"], hpad, opad); b21 = _pad2(params["b2_1"], 1, opad)
    w22 = _pad2(params["w2_2"], hpad if False else opad, opad)  # (nout, nout) Linear
    w22 = _pad2(params["w2_2"], opad, opad); b22 = _pad2(params["b2_2"], 1, opad)

    # Pick the aggregation ordering that puts the narrower feature width on the
    # (N,N)-scaled matmul (exact reassociation, decided at trace time).
    push1 = hpad < fpad     # layer 1: A @ (x @ W11) if nhid narrower than nfeat
    push2 = opad < hpad     # layer 2: A @ (h @ W21) if nout narrower than nhid

    kernel = functools.partial(gin_fused_kernel, eps=eps, push1=push1, push2=push2)
    vmem = lambda: pl.BlockSpec(memory_space=pltpu.MemorySpace.VMEM)

    # Whole-array blocks: at these sizes everything fits comfortably in VMEM.
    # TODO(synk): for large N, tile adj rows (parallel) x cols (arbitrary, last)
    #             with an f32 accumulator scratch; halve the tile plan on v7x.
    out = pl.pallas_call(
        kernel,
        out_shape=jax.ShapeDtypeStruct((n_pad, opad), jnp.float32),
        in_specs=[vmem() for _ in range(10)],
        out_specs=vmem(),
        compiler_params=pltpu.CompilerParams(vmem_limit_bytes=32 << 20),
    )(adjp, xp, w11, b11, w12, b12, w21, b21, w22, b22)

    return out[:n, :nout]


# ----------------------------------------------------------------------------
# Pure-JAX reference (same op order as the PyTorch module, no reassociation).
# ----------------------------------------------------------------------------
def gin_reference(x, adj, params, eps=0.0):
    def conv(x_in, w1, b1, w2, b2):
        z = (1.0 + eps) * x_in + adj @ x_in
        z = jnp.maximum(z @ w1 + b1, 0.0)
        return z @ w2 + b2

    h = jnp.maximum(
        conv(x, params["w1_1"], params["b1_1"], params["w1_2"], params["b1_2"]), 0.0)
    return conv(h, params["w2_1"], params["b2_1"], params["w2_2"], params["b2_2"])


# ----------------------------------------------------------------------------
# Deterministic parameter init (mimics torch.nn.Linear default: U(-1/sqrt(fan_in), +)).
# Weights are stored (in, out) so the kernel computes x @ W + b.
# ----------------------------------------------------------------------------
def init_linear(key, fan_in, fan_out):
    kw, kb = jax.random.split(key)
    bound = 1.0 / jnp.sqrt(float(fan_in))
    w = jax.random.uniform(kw, (fan_in, fan_out), jnp.float32, -bound, bound)
    b = jax.random.uniform(kb, (1, fan_out), jnp.float32, -bound, bound)
    return w, b


def init_gin_params(key, nfeat, nhid, nout):
    k1, k2, k3, k4 = jax.random.split(key, 4)
    w1_1, b1_1 = init_linear(k1, nfeat, nhid)   # gc1 MLP: Linear(nfeat, nhid)
    w1_2, b1_2 = init_linear(k2, nhid, nhid)    #          Linear(nhid, nhid)
    w2_1, b2_1 = init_linear(k3, nhid, nout)    # gc2 MLP: Linear(nhid, out)
    w2_2, b2_2 = init_linear(k4, nout, nout)    #          Linear(out, out)
    return dict(w1_1=w1_1, b1_1=b1_1, w1_2=w1_2, b1_2=b1_2,
                w2_1=w2_1, b2_1=b2_1, w2_2=w2_2, b2_2=b2_2)


if __name__ == "__main__":
    key = jax.random.PRNGKey(0)
    k_x, k_e, k_p = jax.random.split(key, 3)

    # small shapes: 16 nodes, nfeat=16, nhid=32, out=8
    N, NFEAT, NHID, NOUT = 16, 16, 32, 8
    DROPOUT = 0.5

    # node features
    x = jax.random.normal(k_x, (N, NFEAT), jnp.float32)

    # random edge_index (2, E); coalesce() dedup is reproduced by scatter-set
    E = 48
    edge_index = jax.random.randint(k_e, (2, E), 0, N, jnp.int32)
    src, dst = edge_index[0], edge_index[1]
    # dense binary adjacency, A[dst, src] = 1  (message flows src -> dst)
    adj = jnp.zeros((N, N), jnp.float32).at[dst, src].set(1.0)

    params = init_gin_params(k_p, NFEAT, NHID, NOUT)

    out = gin_forward(x, adj, params, dropout=DROPOUT, training=False)
    out = jax.block_until_ready(out)

    assert out.shape == (N, NOUT), out.shape
    assert jnp.all(jnp.isfinite(out))

    ref = jax.block_until_ready(gin_reference(x, adj, params))
    assert jnp.allclose(out, ref, atol=1e-2, rtol=1e-2), \
        float(jnp.max(jnp.abs(out - ref)))

    print("KERNEL_OK")
</pallas_src>

<mosaic_0001>
module attributes {stable_mosaic.version = 11 : i64} {
  func.func @gin_fused_kernel(%arg0: memref<16x16xbf16, #tpu.memory_space<vmem>>, %arg1: memref<16x128xf32, #tpu.memory_space<vmem>>, %arg2: memref<128x128xf32, #tpu.memory_space<vmem>>, %arg3: memref<1x128xf32, #tpu.memory_space<vmem>>, %arg4: memref<128x128xf32, #tpu.memory_space<vmem>>, %arg5: memref<1x128xf32, #tpu.memory_space<vmem>>, %arg6: memref<128x128xf32, #tpu.memory_space<vmem>>, %arg7: memref<1x128xf32, #tpu.memory_space<vmem>>, %arg8: memref<128x128xf32, #tpu.memory_space<vmem>>, %arg9: memref<1x128xf32, #tpu.memory_space<vmem>>, %arg10: memref<16x128xf32, #tpu.memory_space<vmem>>) attributes {dimension_semantics = [], scalar_prefetch = 0 : i64, scratch_operands = 0 : i64, tpu.core_type = #tpu.core_type<tc>} {
    %c0 = arith.constant 0 : index
    %c0_0 = arith.constant 0 : index
    %0 = vector.load %arg0[%c0, %c0_0] : memref<16x16xbf16, #tpu.memory_space<vmem>>, vector<16x16xbf16>
    %1 = arith.extf %0 : vector<16x16xbf16> to vector<16x16xf32>
    %c0_1 = arith.constant 0 : index
    %c0_2 = arith.constant 0 : index
    %2 = vector.load %arg1[%c0_1, %c0_2] : memref<16x128xf32, #tpu.memory_space<vmem>>, vector<16x128xf32>
    %c0_3 = arith.constant 0 : index
    %c0_4 = arith.constant 0 : index
    %3 = vector.load %arg2[%c0_3, %c0_4] : memref<128x128xf32, #tpu.memory_space<vmem>>, vector<128x128xf32>
    %c0_5 = arith.constant 0 : index
    %c0_6 = arith.constant 0 : index
    %4 = vector.load %arg3[%c0_5, %c0_6] : memref<1x128xf32, #tpu.memory_space<vmem>>, vector<1x128xf32>
    %c0_7 = arith.constant 0 : index
    %c0_8 = arith.constant 0 : index
    %5 = vector.load %arg4[%c0_7, %c0_8] : memref<128x128xf32, #tpu.memory_space<vmem>>, vector<128x128xf32>
    %c0_9 = arith.constant 0 : index
    %c0_10 = arith.constant 0 : index
    %6 = vector.load %arg5[%c0_9, %c0_10] : memref<1x128xf32, #tpu.memory_space<vmem>>, vector<1x128xf32>
    %cst = arith.constant dense<0.000000e+00> : vector<16x128xf32>
    %7 = tpu.matmul %1, %2, %cst {dimension_numbers = #tpu.dot_dimension_numbers<[1], [0], [0], [1], [0, 0, 1, 1], [], []>} : vector<16x16xf32>, vector<16x128xf32>, vector<16x128xf32> -> vector<16x128xf32>
    %8 = arith.addf %7, %2 : vector<16x128xf32>
    %cst_11 = arith.constant dense<0.000000e+00> : vector<16x128xf32>
    %9 = tpu.matmul %8, %3, %cst_11 {dimension_numbers = #tpu.dot_dimension_numbers<[1], [0], [0], [1], [0, 0, 1, 1], [], []>} : vector<16x128xf32>, vector<128x128xf32>, vector<16x128xf32> -> vector<16x128xf32>
    %10 = vector.broadcast %4 : vector<1x128xf32> to vector<16x128xf32>
    %11 = arith.addf %9, %10 : vector<16x128xf32>
    %cst_12 = arith.constant 0.000000e+00 : f32
    %12 = vector.broadcast %cst_12 : f32 to vector<16x128xf32>
    %13 = arith.maximumf %11, %12 : vector<16x128xf32>
    %cst_13 = arith.constant dense<0.000000e+00> : vector<16x128xf32>
    %14 = tpu.matmul %13, %5, %cst_13 {dimension_numbers = #tpu.dot_dimension_numbers<[1], [0], [0], [1], [0, 0, 1, 1], [], []>} : vector<16x128xf32>, vector<128x128xf32>, vector<16x128xf32> -> vector<16x128xf32>
    %15 = vector.broadcast %6 : vector<1x128xf32> to vector<16x128xf32>
    %16 = arith.addf %14, %15 : vector<16x128xf32>
    %cst_14 = arith.constant 0.000000e+00 : f32
    %17 = vector.broadcast %cst_14 : f32 to vector<16x128xf32>
    %18 = arith.maximumf %16, %17 : vector<16x128xf32>
    %c0_15 = arith.constant 0 : index
    %c0_16 = arith.constant 0 : index
    %19 = vector.load %arg6[%c0_15, %c0_16] : memref<128x128xf32, #tpu.memory_space<vmem>>, vector<128x128xf32>
    %c0_17 = arith.constant 0 : index
    %c0_18 = arith.constant 0 : index
    %20 = vector.load %arg7[%c0_17, %c0_18] : memref<1x128xf32, #tpu.memory_space<vmem>>, vector<1x128xf32>
    %c0_19 = arith.constant 0 : index
    %c0_20 = arith.constant 0 : index
    %21 = vector.load %arg8[%c0_19, %c0_20] : memref<128x128xf32, #tpu.memory_space<vmem>>, vector<128x128xf32>
    %c0_21 = arith.constant 0 : index
    %c0_22 = arith.constant 0 : index
    %22 = vector.load %arg9[%c0_21, %c0_22] : memref<1x128xf32, #tpu.memory_space<vmem>>, vector<1x128xf32>
    %cst_23 = arith.constant dense<0.000000e+00> : vector<16x128xf32>
    %23 = tpu.matmul %1, %18, %cst_23 {dimension_numbers = #tpu.dot_dimension_numbers<[1], [0], [0], [1], [0, 0, 1, 1], [], []>} : vector<16x16xf32>, vector<16x128xf32>, vector<16x128xf32> -> vector<16x128xf32>
    %24 = arith.addf %23, %18 : vector<16x128xf32>
    %cst_24 = arith.constant dense<0.000000e+00> : vector<16x128xf32>
    %25 = tpu.matmul %24, %19, %cst_24 {dimension_numbers = #tpu.dot_dimension_numbers<[1], [0], [0], [1], [0, 0, 1, 1], [], []>} : vector<16x128xf32>, vector<128x128xf32>, vector<16x128xf32> -> vector<16x128xf32>
    %26 = vector.broadcast %20 : vector<1x128xf32> to vector<16x128xf32>
    %27 = arith.addf %25, %26 : vector<16x128xf32>
    %cst_25 = arith.constant 0.000000e+00 : f32
    %28 = vector.broadcast %cst_25 : f32 to vector<16x128xf32>
    %29 = arith.maximumf %27, %28 : vector<16x128xf32>
    %cst_26 = arith.constant dense<0.000000e+00> : vector<16x128xf32>
    %30 = tpu.matmul %29, %21, %cst_26 {dimension_numbers = #tpu.dot_dimension_numbers<[1], [0], [0], [1], [0, 0, 1, 1], [], []>} : vector<16x128xf32>, vector<128x128xf32>, vector<16x128xf32> -> vector<16x128xf32>
    %31 = vector.broadcast %22 : vector<1x128xf32> to vector<16x128xf32>
    %32 = arith.addf %30, %31 : vector<16x128xf32>
    %c0_27 = arith.constant 0 : index
    %c0_28 = arith.constant 0 : index
    %33 = vector.load %arg10[%c0_27, %c0_28] : memref<16x128xf32, #tpu.memory_space<vmem>>, vector<16x128xf32>
    tpu.vector_store %arg10[%c0_27, %c0_28], %32 {strides = array<i32>} : memref<16x128xf32, #tpu.memory_space<vmem>>, vector<16x128xf32>,
    return
  }
}

</mosaic_0001>

<llo_original>
// kernel: tpu_custom_call.1
$region0: #{tpu_custom_call.1}
  #allocation0 [shape = 'u32[]', space=smem, size = 0x4, offset = 0x4, fixed_abs, tag = 'smem constant byte address 0x4 - core index']
  #allocation1 [shape = 'u32[72,128]{1,0:T(1,128)}', space=vmem, size = 0x9000, scoped, tag = 'internal scratch']
  %s0 = inlined_call_operand.hbm [shape: bf16[16,16], index: 0, kind: input, shape index: {}]
  %s1 = inlined_call_operand.hbm [shape: f32[16,128], index: 1, kind: input, shape index: {}]
  %s2 = inlined_call_operand.hbm [shape: f32[128,128], index: 2, kind: input, shape index: {}]
  %s3 = inlined_call_operand.vmem [shape: f32[1,128], index: 3, kind: input, shape index: {}]
  %s4 = inlined_call_operand.hbm [shape: f32[128,128], index: 4, kind: input, shape index: {}]
  %s5 = inlined_call_operand.vmem [shape: f32[1,128], index: 5, kind: input, shape index: {}]
  %s6 = inlined_call_operand.hbm [shape: f32[128,128], index: 6, kind: input, shape index: {}]
  %s7 = inlined_call_operand.vmem [shape: f32[1,128], index: 7, kind: input, shape index: {}]
  %s8 = inlined_call_operand.hbm [shape: f32[128,128], index: 8, kind: input, shape index: {}]
  %s9 = inlined_call_operand.vmem [shape: f32[1,128], index: 9, kind: input, shape index: {}]
  %s10 = inlined_call_operand.hbm [shape: f32[16,128], index: 10, kind: output, shape index: {}]
  %s11 = sld [smem:[#allocation0]]
  $region74: #{tpu_custom_call.1} parent=0
    _
  %s13 = ssub.s32 1, %s11
  %s14 = scalar_select 0, %s13, %s11
  $region1: #{tpu_custom_call.1} parent=0
    #allocation2 [shape = 'u8[4096]{0}', space=vmem, size = 0x1000, scoped, tag = 'input window, operand 0, single buffered']
    #allocation3 [shape = 's32[1]{0}', space=sflag, size = 0x4, scoped, tag = 'scoped memory for tpu_custom_call.1']
    #allocation4 [shape = 's32[1]{0}', space=sflag, size = 0x4, scoped, tag = 'scoped memory for tpu_custom_call.1']
    #allocation5 [shape = 'u8[8192]{0}', space=vmem, size = 0x2000, scoped, tag = 'input window, operand 1, single buffered']
    #allocation6 [shape = 's32[1]{0}', space=sflag, size = 0x4, scoped, tag = 'scoped memory for tpu_custom_call.1']
    #allocation7 [shape = 'u8[65536]{0}', space=vmem, size = 0x10000, scoped, tag = 'input window, operand 2, single buffered']
    #allocation8 [shape = 'u8[65536]{0}', space=vmem, size = 0x10000, scoped, tag = 'input window, operand 4, single buffered']
    #allocation9 [shape = 's32[1]{0}', space=sflag, size = 0x4, scoped, tag = 'scoped memory for tpu_custom_call.1']
    #allocation10 [shape = 'u8[65536]{0}', space=vmem, size = 0x10000, scoped, tag = 'input window, operand 6, single buffered']
    #allocation11 [shape = 'u8[65536]{0}', space=vmem, size = 0x10000, scoped, tag = 'input window, operand 8, single buffered']
    #allocation12 [shape = 's32[1]{0}', space=sflag, size = 0x4, scoped, tag = 'scoped memory for tpu_custom_call.1']
    #allocation13 [shape = 'u8[8192]{0}', space=vmem, size = 0x2000, scoped, tag = 'output window, operand 0, single buffered']
    %15 = vsyncpa [#allocation3], 0
    %16 = vsyncpa [#allocation6], 0
    %17 = vsyncpa [#allocation9], 0
    %18 = vsyncpa [#allocation12], 0
    %19 = vsyncpa [#allocation4], 0
    // Predicated region
    $region2: #{tpu_custom_call.1} parent=1 // pred_check
      _
    $region3: #{tpu_custom_call.1} parent=1 // pred_check_branch
      %21 = sbr.rel (0) target = $region5
    $region4: #{tpu_custom_call.1} parent=1 // pred_region
      %23 = vsyncadd [#allocation3], 0
      %s24 = sshll.u32 %s0, 4
      %s25 = int_to_ptr.hbm [resolvable:$true] %s24
      %s26 = sshll.u32 [#allocation2], 4
      %s27 = int_to_ptr.vmem [resolvable:$true] %s26
      %32 = dma.hbm_to_vmem [thread:$0]  %s25, 128, %s27, [#allocation3], 64, 64, 4
    $region5: #{tpu_custom_call.1} parent=1 // pred_fallthru
      _
    // Predicated region
    $region6: #{tpu_custom_call.1} parent=1 // pred_check
      _
    $region7: #{tpu_custom_call.1} parent=1 // pred_check_branch
      %34 = sbr.rel (0) target = $region9
    $region8: #{tpu_custom_call.1} parent=1 // pred_region
      %36 = vsyncadd [#allocation6], 0
      %s37 = sshll.u32 %s1, 4
      %s38 = int_to_ptr.hbm [resolvable:$true] %s37
      %s39 = sshll.u32 [#allocation5], 4
      %s40 = int_to_ptr.vmem [resolvable:$true] %s39
      %45 = dma.hbm_to_vmem [thread:$0]  %s38, 256, %s40, [#allocation6], 128, 128, 8
    $region9: #{tpu_custom_call.1} parent=1 // pred_fallthru
      _
    // Predicated region
    $region10: #{tpu_custom_call.1} parent=1 // pred_check
      _
    $region11: #{tpu_custom_call.1} parent=1 // pred_check_branch
      %47 = sbr.rel (0) target = $region13
    $region12: #{tpu_custom_call.1} parent=1 // pred_region
      %49 = vsyncadd [#allocation6], 0
      %s50 = sshll.u32 %s2, 4
      %s51 = int_to_ptr.hbm [resolvable:$true] %s50
      %s52 = sshll.u32 [#allocation7], 4
      %s53 = int_to_ptr.vmem [resolvable:$true] %s52
      %58 = dma.hbm_to_vmem [thread:$0]  %s51, 2048, %s53, [#allocation6], 128, 128, 8
    $region13: #{tpu_custom_call.1} parent=1 // pred_fallthru
      _
    // Predicated region
    $region14: #{tpu_custom_call.1} parent=1 // pred_check
      _
    $region15: #{tpu_custom_call.1} parent=1 // pred_check_branch
      %60 = sbr.rel (0) target = $region17
    $region16: #{tpu_custom_call.1} parent=1 // pred_region
      _
    $region17: #{tpu_custom_call.1} parent=1 // pred_fallthru
      _
    // Predicated region
    $region18: #{tpu_custom_call.1} parent=1 // pred_check
      _
    $region19: #{tpu_custom_call.1} parent=1 // pred_check_branch
      %62 = sbr.rel (0) target = $region21
    $region20: #{tpu_custom_call.1} parent=1 // pred_region
      %64 = vsyncadd [#allocation9], 0
      %s65 = sshll.u32 %s4, 4
      %s66 = int_to_ptr.hbm [resolvable:$true] %s65
      %s67 = sshll.u32 [#allocation8], 4
      %s68 = int_to_ptr.vmem [resolvable:$true] %s67
      %73 = dma.hbm_to_vmem [thread:$0]  %s66, 2048, %s68, [#allocation9], 128, 128, 8
    $region21: #{tpu_custom_call.1} parent=1 // pred_fallthru
      _
    // Predicated region
    $region22: #{tpu_custom_call.1} parent=1 // pred_check
      _
    $region23: #{tpu_custom_call.1} parent=1 // pred_check_branch
      %75 = sbr.rel (0) target = $region25
    $region24: #{tpu_custom_call.1} parent=1 // pred_region
      _
    $region25: #{tpu_custom_call.1} parent=1 // pred_fallthru
      _
    // Predicated region
    $region26: #{tpu_custom_call.1} parent=1 // pred_check
      _
    $region27: #{tpu_custom_call.1} parent=1 // pred_check_branch
      %77 = sbr.rel (0) target = $region29
    $region28: #{tpu_custom_call.1} parent=1 // pred_region
      %79 = vsyncadd [#allocation9], 0
      %s80 = sshll.u32 %s6, 4
      %s81 = int_to_ptr.hbm [resolvable:$true] %s80
      %s82 = sshll.u32 [#allocation10], 4
      %s83 = int_to_ptr.vmem [resolvable:$true] %s82
      %88 = dma.hbm_to_vmem [thread:$0]  %s81, 2048, %s83, [#allocation9], 128, 128, 8
    $region29: #{tpu_custom_call.1} parent=1 // pred_fallthru
      _
    // Predicated region
    $region30: #{tpu_custom_call.1} parent=1 // pred_check
      _
    $region31: #{tpu_custom_call.1} parent=1 // pred_check_branch
      %90 = sbr.rel (0) target = $region33
    $region32: #{tpu_custom_call.1} parent=1 // pred_region
      _
    $region33: #{tpu_custom_call.1} parent=1 // pred_fallthru
      _
    // Predicated region
    $region34: #{tpu_custom_call.1} parent=1 // pred_check
      _
    $region35: #{tpu_custom_call.1} parent=1 // pred_check_branch
      %92 = sbr.rel (0) target = $region37
    $region36: #{tpu_custom_call.1} parent=1 // pred_region
      %94 = vsyncadd [#allocation12], 0
      %s95 = sshll.u32 %s8, 4
      %s96 = int_to_ptr.hbm [resolvable:$true] %s95
      %s97 = sshll.u32 [#allocation11], 4
      %s98 = int_to_ptr.vmem [resolvable:$true] %s97
      %103 = dma.hbm_to_vmem [thread:$0]  %s96, 2048, %s98, [#allocation12], 128, 128, 8
    $region37: #{tpu_custom_call.1} parent=1 // pred_fallthru
      _
    // Predicated region
    $region38: #{tpu_custom_call.1} parent=1 // pred_check
      _
    $region39: #{tpu_custom_call.1} parent=1 // pred_check_branch
      %105 = sbr.rel (0) target = $region41
    $region40: #{tpu_custom_call.1} parent=1 // pred_region
      _
    $region41: #{tpu_custom_call.1} parent=1 // pred_fallthru
      _
    // Predicated region
    $region42: #{tpu_custom_call.1} parent=1 // pred_check
      _
    $region43: #{tpu_custom_call.1} parent=1 // pred_check_branch
      %107 = sbr.rel (0) target = $region45
    $region44: #{tpu_custom_call.1} parent=1 // pred_region
      %109 = dma.done [#allocation3], 128
    $region45: #{tpu_custom_call.1} parent=1 // pred_fallthru
      _
    // Predicated region
    $region46: #{tpu_custom_call.1} parent=1 // pred_check
      _
    $region47: #{tpu_custom_call.1} parent=1 // pred_check_branch
      %111 = sbr.rel (0) target = $region49
    $region48: #{tpu_custom_call.1} parent=1 // pred_region
      %113 = dma.done [#allocation6], 256
    $region49: #{tpu_custom_call.1} parent=1 // pred_fallthru
      _
    // Predicated region
    $region50: #{tpu_custom_call.1} parent=1 // pred_check
      _
    $region51: #{tpu_custom_call.1} parent=1 // pred_check_branch
      %115 = sbr.rel (0) target = $region53
    $region52: #{tpu_custom_call.1} parent=1 // pred_region
      %117 = dma.done [#allocation6], 2048
    $region53: #{tpu_custom_call.1} parent=1 // pred_fallthru
      _
    // Predicated region
    $region54: #{tpu_custom_call.1} parent=1 // pred_check
      _
    $region55: #{tpu_custom_call.1} parent=1 // pred_check_branch
      %119 = sbr.rel (0) target = $region57
    $region56: #{tpu_custom_call.1} parent=1 // pred_region
      %121 = dma.done [#allocation9], 2048
    $region57: #{tpu_custom_call.1} parent=1 // pred_fallthru
      _
    // Predicated region
    $region58: #{tpu_custom_call.1} parent=1 // pred_check
      _
    $region59: #{tpu_custom_call.1} parent=1 // pred_check_branch
      %123 = sbr.rel (0) target = $region61
    $region60: #{tpu_custom_call.1} parent=1 // pred_region
      %125 = dma.done [#allocation9], 2048
    $region61: #{tpu_custom_call.1} parent=1 // pred_fallthru
      _
    // Predicated region
    $region62: #{tpu_custom_call.1} parent=1 // pred_check
      _
    $region63: #{tpu_custom_call.1} parent=1 // pred_check_branch
      %127 = sbr.rel (0) target = $region65
    $region64: #{tpu_custom_call.1} parent=1 // pred_region
      %129 = dma.done [#allocation12], 2048
    $region65: #{tpu_custom_call.1} parent=1 // pred_fallthru
      _
    %v130 = vld [vmem:[#allocation2] sm:$0xf]
    %v131 = vld [vmem:[#allocation2 + $0x4] sm:$0xf]
    %v132 = vunpack.c.l.bf16 %v130
    %v133 = vunpack.c.l.bf16 %v131
    %v134 = vld [vmem:[#allocation5] sm:$0xff]
    %v135 = vld [vmem:[#allocation5 + $0x8] sm:$0xff]
    %v136 = vld [vmem:[#allocation7] sm:$0xff]
    %v137 = vld [vmem:[#allocation7 + $0x8] sm:$0xff]
    %v138 = vld [vmem:[#allocation7 + $0x10] sm:$0xff]
    %v139 = vld [vmem:[#allocation7 + $0x18] sm:$0xff]
    %v140 = vld [vmem:[#allocation7 + $0x20] sm:$0xff]
    %v141 = vld [vmem:[#allocation7 + $0x28] sm:$0xff]
    %v142 = vld [vmem:[#allocation7 + $0x30] sm:$0xff]
    %v143 = vld [vmem:[#allocation7 + $0x38] sm:$0xff]
    %v144 = vld [vmem:[#allocation7 + $0x40] sm:$0xff]
    %v145 = vld [vmem:[#allocation7 + $0x48] sm:$0xff]
    %v146 = vld [vmem:[#allocation7 + $0x50] sm:$0xff]
    %v147 = vld [vmem:[#allocation7 + $0x58] sm:$0xff]
    %v148 = vld [vmem:[#allocation7 + $0x60] sm:$0xff]
    %v149 = vld [vmem:[#allocation7 + $0x68] sm:$0xff]
    %v150 = vld [vmem:[#allocation7 + $0x70] sm:$0xff]
    %v151 = vld [vmem:[#allocation7 + $0x78] sm:$0xff]
    %v152 = vld [vmem:[%s3] sm:$0x1]
    %v153 = vld [vmem:[#allocation8] sm:$0xff]
    %v154 = vld [vmem:[#allocation8 + $0x8] sm:$0xff]
    %v155 = vld [vmem:[#allocation8 + $0x10] sm:$0xff]
    %v156 = vld [vmem:[#allocation8 + $0x18] sm:$0xff]
    %v157 = vld [vmem:[#allocation8 + $0x20] sm:$0xff]
    %v158 = vld [vmem:[#allocation8 + $0x28] sm:$0xff]
    %v159 = vld [vmem:[#allocation8 + $0x30] sm:$0xff]
    %v160 = vld [vmem:[#allocation8 + $0x38] sm:$0xff]
    %v161 = vld [vmem:[#allocation8 + $0x40] sm:$0xff]
    %v162 = vld [vmem:[#allocation8 + $0x48] sm:$0xff]
    %v163 = vld [vmem:[#allocation8 + $0x50] sm:$0xff]
    %v164 = vld [vmem:[#allocation8 + $0x58] sm:$0xff]
    %v165 = vld [vmem:[#allocation8 + $0x60] sm:$0xff]
    %v166 = vld [vmem:[#allocation8 + $0x68] sm:$0xff]
    %v167 = vld [vmem:[#allocation8 + $0x70] sm:$0xff]
    %v168 = vld [vmem:[#allocation8 + $0x78] sm:$0xff]
    %v169 = vld [vmem:[%s5] sm:$0x1]
    %vm170 = vcmask 130048
    %v172 = vsel %vm170, %v132, 0
    %v175 = vsel %vm170, %v133, 0
    %177 = vmatpush.msra.mxu0 0.0
    %178 = vmatpush.msra.mxu0 0.0
    %179 = vmatpush.msra.mxu0 0.0
    %180 = vmatpush.msra.mxu0 0.0
    %181 = vmatpush.msra.mxu0 0.0
    %182 = vmatpush.msra.mxu0 0.0
    %183 = vmatpush.msra.mxu0 0.0
    %184 = vmatpush.msra.mxu0 0.0
    %185 = vmatpush.msra.mxu0 0.0
    %186 = vmatpush.msra.mxu0 0.0
    %187 = vmatpush.msra.mxu0 0.0
    %188 = vmatpush.msra.mxu0 0.0
    %189 = vmatpush.msra.mxu0 0.0
    %190 = vmatpush.msra.mxu0 0.0
    %191 = vmatpush.msra.mxu0 %v135
    %192 = vmatpush.msra.mxu0 %v134
    %193 = vmatmul.f32.gmra.mxu0 %v172
    %v194 = vpop.f32.mrf.mxu0
    %v195 = vadd.f32 %v134, %v194
    %196 = vmatmul.f32.gmra.mxu0 %v175
    %v197 = vpop.f32.mrf.mxu0
    %v198 = vadd.f32 %v135, %v197
    %199 = vdwg.mxu0
    %v201 = vperm.slane %v152, 0
    %203 = vmatpush.msra.mxu0 %v151
    %204 = vmatpush.msra.mxu0 %v150
    %205 = vmatpush.msra.mxu0 %v149
    %206 = vmatpush.msra.mxu0 %v148
    %207 = vmatpush.msra.mxu0 %v147
    %208 = vmatpush.msra.mxu0 %v146
    %209 = vmatpush.msra.mxu0 %v145
    %210 = vmatpush.msra.mxu0 %v144
    %211 = vmatpush.msra.mxu0 %v143
    %212 = vmatpush.msra.mxu0 %v142
    %213 = vmatpush.msra.mxu0 %v141
    %214 = vmatpush.msra.mxu0 %v140
    %215 = vmatpush.msra.mxu0 %v139
    %216 = vmatpush.msra.mxu0 %v138
    %217 = vmatpush.msra.mxu0 %v137
    %218 = vmatpush.msra.mxu0 %v136
    %219 = vmatmul.f32.gmra.mxu0 %v195
    %v220 = vpop.f32.mrf.mxu0
    %v221 = vadd.f32 %v201, %v220
    %222 = vmatmul.f32.gmra.mxu0 %v198
    %v223 = vpop.f32.mrf.mxu0
    %v224 = vadd.f32 %v201, %v223
    %225 = vdwg.mxu0
    %v226 = vmax.f32 %v221, 0.0
    %v227 = vmax.f32 %v224, 0.0
    %v229 = vperm.slane %v169, 0
    %231 = vmatpush.msra.mxu0 %v168
    %232 = vmatpush.msra.mxu0 %v167
    %233 = vmatpush.msra.mxu0 %v166
    %234 = vmatpush.msra.mxu0 %v165
    %235 = vmatpush.msra.mxu0 %v164
    %236 = vmatpush.msra.mxu0 %v163
    %237 = vmatpush.msra.mxu0 %v162
    %238 = vmatpush.msra.mxu0 %v161
    %239 = vmatpush.msra.mxu0 %v160
    %240 = vmatpush.msra.mxu0 %v159
    %241 = vmatpush.msra.mxu0 %v158
    %242 = vmatpush.msra.mxu0 %v157
    %243 = vmatpush.msra.mxu0 %v156
    %244 = vmatpush.msra.mxu0 %v155
    %245 = vmatpush.msra.mxu0 %v154
    %246 = vmatpush.msra.mxu0 %v153
    %247 = vmatmul.f32.gmra.mxu0 %v226
    %v248 = vpop.f32.mrf.mxu0
    %v249 = vadd.f32 %v229, %v248
    %250 = vmatmul.f32.gmra.mxu0 %v227
    %v251 = vpop.f32.mrf.mxu0
    %v252 = vadd.f32 %v229, %v251
    %253 = vdwg.mxu0
    %v254 = vmax.f32 %v249, 0.0
    %v255 = vmax.f32 %v252, 0.0
    %v256 = vld [vmem:[#allocation10] sm:$0xff]
    %v257 = vld [vmem:[#allocation10 + $0x8] sm:$0xff]
    %v258 = vld [vmem:[#allocation10 + $0x10] sm:$0xff]
    %v259 = vld [vmem:[#allocation10 + $0x18] sm:$0xff]
    %v260 = vld [vmem:[#allocation10 + $0x20] sm:$0xff]
    %v261 = vld [vmem:[#allocation10 + $0x28] sm:$0xff]
    %v262 = vld [vmem:[#allocation10 + $0x30] sm:$0xff]
    %v263 = vld [vmem:[#allocation10 + $0x38] sm:$0xff]
    %v264 = vld [vmem:[#allocation10 + $0x40] sm:$0xff]
    %v265 = vld [vmem:[#allocation10 + $0x48] sm:$0xff]
    %v266 = vld [vmem:[#allocation10 + $0x50] sm:$0xff]
    %v267 = vld [vmem:[#allocation10 + $0x58] sm:$0xff]
    %v268 = vld [vmem:[#allocation10 + $0x60] sm:$0xff]
    %v269 = vld [vmem:[#allocation10 + $0x68] sm:$0xff]
    %v270 = vld [vmem:[#allocation10 + $0x70] sm:$0xff]
    %v271 = vld [vmem:[#allocation10 + $0x78] sm:$0xff]
    %v272 = vld [vmem:[%s7] sm:$0x1]
    %v273 = vld [vmem:[#allocation11] sm:$0xff]
    %v274 = vld [vmem:[#allocation11 + $0x8] sm:$0xff]
    %v275 = vld [vmem:[#allocation11 + $0x10] sm:$0xff]
    %v276 = vld [vmem:[#allocation11 + $0x18] sm:$0xff]
    %v277 = vld [vmem:[#allocation11 + $0x20] sm:$0xff]
    %v278 = vld [vmem:[#allocation11 + $0x28] sm:$0xff]
    %v279 = vld [vmem:[#allocation11 + $0x30] sm:$0xff]
    %v280 = vld [vmem:[#allocation11 + $0x38] sm:$0xff]
    %v281 = vld [vmem:[#allocation11 + $0x40] sm:$0xff]
    %v282 = vld [vmem:[#allocation11 + $0x48] sm:$0xff]
    %v283 = vld [vmem:[#allocation11 + $0x50] sm:$0xff]
    %v284 = vld [vmem:[#allocation11 + $0x58] sm:$0xff]
    %v285 = vld [vmem:[#allocation11 + $0x60] sm:$0xff]
    %v286 = vld [vmem:[#allocation11 + $0x68] sm:$0xff]
    %v287 = vld [vmem:[#allocation11 + $0x70] sm:$0xff]
    %v288 = vld [vmem:[#allocation11 + $0x78] sm:$0xff]
    %v289 = vld [vmem:[%s9] sm:$0x1]
    %290 = vmatpush.msra.mxu0 0.0
    %291 = vmatpush.msra.mxu0 0.0
    %292 = vmatpush.msra.mxu0 0.0
    %293 = vmatpush.msra.mxu0 0.0
    %294 = vmatpush.msra.mxu0 0.0
    %295 = vmatpush.msra.mxu0 0.0
    %296 = vmatpush.msra.mxu0 0.0
    %297 = vmatpush.msra.mxu0 0.0
    %298 = vmatpush.msra.mxu0 0.0
    %299 = vmatpush.msra.mxu0 0.0
    %300 = vmatpush.msra.mxu0 0.0
    %301 = vmatpush.msra.mxu0 0.0
    %302 = vmatpush.msra.mxu0 0.0
    %303 = vmatpush.msra.mxu0 0.0
    %304 = vmatpush.msra.mxu0 %v255
    %305 = vmatpush.msra.mxu0 %v254
    %306 = vmatmul.f32.gmra.mxu0 %v172
    %v307 = vpop.f32.mrf.mxu0
    %v308 = vadd.f32 %v254, %v307
    %309 = vmatmul.f32.gmra.mxu0 %v175
    %v310 = vpop.f32.mrf.mxu0
    %v311 = vadd.f32 %v255, %v310
    %312 = vdwg.mxu0
    %v314 = vperm.slane %v272, 0
    %316 = vmatpush.msra.mxu0 %v271
    %317 = vmatpush.msra.mxu0 %v270
    %318 = vmatpush.msra.mxu0 %v269
    %319 = vmatpush.msra.mxu0 %v268
    %320 = vmatpush.msra.mxu0 %v267
    %321 = vmatpush.msra.mxu0 %v266
    %322 = vmatpush.msra.mxu0 %v265
    %323 = vmatpush.msra.mxu0 %v264
    %324 = vmatpush.msra.mxu0 %v263
    %325 = vmatpush.msra.mxu0 %v262
    %326 = vmatpush.msra.mxu0 %v261
    %327 = vmatpush.msra.mxu0 %v260
    %328 = vmatpush.msra.mxu0 %v259
    %329 = vmatpush.msra.mxu0 %v258
    %330 = vmatpush.msra.mxu0 %v257
    %331 = vmatpush.msra.mxu0 %v256
    %332 = vmatmul.f32.gmra.mxu0 %v308
    %v333 = vpop.f32.mrf.mxu0
    %v334 = vadd.f32 %v314, %v333
    %335 = vmatmul.f32.gmra.mxu0 %v311
    %v336 = vpop.f32.mrf.mxu0
    %v337 = vadd.f32 %v314, %v336
    %338 = vdwg.mxu0
    %v339 = vmax.f32 %v334, 0.0
    %v340 = vmax.f32 %v337, 0.0
    %v342 = vperm.slane %v289, 0
    %344 = vmatpush.msra.mxu0 %v288
    %345 = vmatpush.msra.mxu0 %v287
    %346 = vmatpush.msra.mxu0 %v286
    %347 = vmatpush.msra.mxu0 %v285
    %348 = vmatpush.msra.mxu0 %v284
    %349 = vmatpush.msra.mxu0 %v283
    %350 = vmatpush.msra.mxu0 %v282
    %351 = vmatpush.msra.mxu0 %v281
    %352 = vmatpush.msra.mxu0 %v280
    %353 = vmatpush.msra.mxu0 %v279
    %354 = vmatpush.msra.mxu0 %v278
    %355 = vmatpush.msra.mxu0 %v277
    %356 = vmatpush.msra.mxu0 %v276
    %357 = vmatpush.msra.mxu0 %v275
    %358 = vmatpush.msra.mxu0 %v274
    %359 = vmatpush.msra.mxu0 %v273
    %360 = vmatmul.f32.gmra.mxu0 %v339
    %v361 = vpop.f32.mrf.mxu0
    %v362 = vadd.f32 %v342, %v361
    %363 = vmatmul.f32.gmra.mxu0 %v340
    %v364 = vpop.f32.mrf.mxu0
    %v365 = vadd.f32 %v342, %v364
    %366 = vdwg.mxu0
    %367 = vst [vmem:[#allocation13] sm:$0xff] %v362
    %368 = vst [vmem:[#allocation13 + $0x8] sm:$0xff] %v365
    // Predicated region
    $region66: #{tpu_custom_call.1} parent=1 // pred_check
      _
    $region67: #{tpu_custom_call.1} parent=1 // pred_check_branch
      %370 = sbr.rel (0) target = $region69
    $region68: #{tpu_custom_call.1} parent=1 // pred_region
      %372 = vsyncadd [#allocation4], 0
      %s373 = sshll.u32 [#allocation13], 4
      %s374 = int_to_ptr.vmem [resolvable:$true] %s373
      %s375 = sshll.u32 %s10, 4
      %s376 = int_to_ptr.hbm [resolvable:$true] %s375
      %381 = dma.vmem_to_hbm [thread:$0]  %s374, 256, %s376, [#allocation4], 128, 128, 8
    $region69: #{tpu_custom_call.1} parent=1 // pred_fallthru
      _
    // Predicated region
    $region70: #{tpu_custom_call.1} parent=1 // pred_check
      _
    $region71: #{tpu_custom_call.1} parent=1 // pred_check_branch
      %383 = sbr.rel (0) target = $region73
    $region72: #{tpu_custom_call.1} parent=1 // pred_region
      %385 = dma.done [#allocation4], 256
    $region73: #{tpu_custom_call.1} parent=1 // pred_fallthru
      _
    %386 = vsyncpa [#allocation3], 1
    %387 = vsyncpa [#allocation6], 1
    %388 = vsyncpa [#allocation9], 1
    %389 = vsyncpa [#allocation12], 1
    %390 = vsyncpa [#allocation4], 1

</llo_original>
